<compile_context>
chip_gen: v7x
topology: tpu7x:2x2x1
jax: 0.10.0
libtpu: 0.0.40
codegen_flags: <defaults>
</compile_context>

<pallas_src>
import functools

import jax
import jax.numpy as jnp
from jax import lax
from jax.experimental import pallas as pl
from jax.experimental.pallas import tpu as pltpu


def _round_up(x, m):
    return (x + m - 1) // m * m


_SQRT_HALF = 0.7071067811865475


# ---------------------------------------------------------------------------
# Kernel
# ---------------------------------------------------------------------------
def _mlp_kernel(x_ref, w1_ref, b1_ref, w2_ref, b2_ref, o_ref, acc_ref, *, exact_gelu):
    # grid = (row_tiles, hidden_tiles); hidden axis is the fc2 reduction axis.
    k = pl.program_id(1)

    @pl.when(k == 0)
    def _():
        acc_ref[...] = jnp.zeros_like(acc_ref)

    # fc1 partial: (tm, Cin) @ (Cin, th) -> f32, + bias slice
    h = jnp.dot(x_ref[...], w1_ref[...], preferred_element_type=jnp.float32)
    h = h + b1_ref[...]

    if exact_gelu:
        # exact GELU (erf-based) -- matches torch.nn.GELU(approximate='none')
        h = 0.5 * h * (1.0 + lax.erf(h * jnp.float32(_SQRT_HALF)))
    else:
        # tanh-approximate GELU: tanh goes to the EUP (its own VLIW slot),
        # relieving the VALU once the kernel is MXU-bound (v6e/v7x).
        h = jax.nn.gelu(h, approximate=True)
    # dropout p=0.0 -> identity

    # fc2 partial: (tm, th) @ (th, Cout), accumulate in f32
    acc_ref[...] += jnp.dot(
        h.astype(w2_ref.dtype), w2_ref[...], preferred_element_type=jnp.float32
    )

    @pl.when(k == pl.num_programs(1) - 1)
    def _():
        o_ref[...] = (acc_ref[...] + b2_ref[...]).astype(o_ref.dtype)


# ---------------------------------------------------------------------------
# Generation-aware tile selection
# ---------------------------------------------------------------------------
def _vmem_capacity_bytes():
    try:
        return int(pltpu.get_tpu_info().vmem_capacity_bytes)
    except Exception:
        return 128 * 1024 * 1024  # conservative default (v5e/v6e)


def _pick_tiles(M, Cin_p, H_p, Cout_p, out_bytes, param_bytes=2):
    cap = _vmem_capacity_bytes()
    small_vmem = cap <= 80 * 1024 * 1024  # v7x-like: 64 MiB per TensorCore

    if small_vmem:
        tm_target, th_target = 512, 1024
        budget = 40 * 1024 * 1024  # leave room for double buffering on 64 MiB
    else:
        tm_target, th_target = 1024, 1024
        budget = 96 * 1024 * 1024

    M_128 = _round_up(M, 128)
    if small_vmem:
        # v7x has 2 TensorCores sharding the 'parallel' row axis:
        # keep at least 2 row tiles so both cores stay busy.
        tm_target = min(tm_target, _round_up(pl.cdiv(M_128, 2), 256))
    tm_e = min(tm_target, M_128)

    # th: largest multiple of 128 that divides H_p exactly (no padded zero work).
    th_e = max(128, min(th_target, H_p) // 128 * 128)
    while H_p % th_e != 0:
        th_e -= 128

    def footprint(tm, th):
        per_step = (
            tm * Cin_p * param_bytes      # x tile
            + Cin_p * th * param_bytes    # W1 slice
            + th * 4                      # b1 slice (f32)
            + th * Cout_p * param_bytes   # W2 slice
            + Cout_p * 4                  # b2 (f32)
            + tm * Cout_p * out_bytes     # out tile
        )
        # double-buffered pipeline buffers + resident f32 acc + f32 h temp
        return 2 * per_step + tm * Cout_p * 4 + tm * th * 4

    # Shrink tiles until the footprint fits the per-generation budget.
    while footprint(tm_e, th_e) > budget and (tm_e > 256 or th_e > 256):
        if th_e > 256:
            t = th_e - 128
            while H_p % t != 0:
                t -= 128
            th_e = t
        else:
            tm_e = max(256, (tm_e // 2) // 128 * 128)

    vmem_limit = footprint(tm_e, th_e) + 8 * 1024 * 1024
    vmem_limit = max(vmem_limit, 32 * 1024 * 1024)
    vmem_limit = min(vmem_limit, int(cap * 0.75))
    return tm_e, th_e, vmem_limit


# ---------------------------------------------------------------------------
# Params preparation (one-time: pad + cast weights out of the hot path)
# ---------------------------------------------------------------------------
def prepare_mlp_params(w1, b1, w2, b2, param_dtype=jnp.bfloat16):
    """w1: (Cin, H); b1: (H,); w2: (H, Cout); b2: (Cout,)."""
    Cin, H = w1.shape
    Cout = w2.shape[1]
    Cin_p, H_p, Cout_p = _round_up(Cin, 128), _round_up(H, 128), _round_up(Cout, 128)
    return {
        "w1": jnp.pad(w1, ((0, Cin_p - Cin), (0, H_p - H))).astype(param_dtype),
        "b1": jnp.pad(b1, (0, H_p - H)).astype(jnp.float32).reshape(1, H_p),
        "w2": jnp.pad(w2, ((0, H_p - H), (0, Cout_p - Cout))).astype(param_dtype),
        "b2": jnp.pad(b2, (0, Cout_p - Cout)).astype(jnp.float32).reshape(1, Cout_p),
        "Cin": Cin,
        "Cout": Cout,
        "param_dtype": param_dtype,
    }


# ---------------------------------------------------------------------------
# Forward
# ---------------------------------------------------------------------------
def mlp_pallas(x, params, *, exact_gelu=True):
    """x: (M, Cin) -> (M, Cout).  Output dtype follows x."""
    M, Cin = x.shape
    assert Cin == params["Cin"], "in_features mismatch"
    w1p, b1p, w2p, b2p = params["w1"], params["b1"], params["w2"], params["b2"]
    param_dtype = params["param_dtype"]
    Cin_p, H_p = w1p.shape
    Cout_p = w2p.shape[1]
    Cout = params["Cout"]
    out_dtype = x.dtype
    out_bytes = jnp.dtype(out_dtype).itemsize

    tm_e, th_e, vmem_limit = _pick_tiles(M, Cin_p, H_p, Cout_p, out_bytes)
    M_p = _round_up(M, tm_e)

    if (M_p, Cin_p) != (M, Cin) or x.dtype != param_dtype:
        xb = jnp.pad(x, ((0, M_p - M), (0, Cin_p - Cin))).astype(param_dtype)
    else:
        xb = x

    grid = (M_p // tm_e, H_p // th_e)
    kernel = functools.partial(_mlp_kernel, exact_gelu=exact_gelu)

    out = pl.pallas_call(
        kernel,
        out_shape=jax.ShapeDtypeStruct((M_p, Cout_p), out_dtype),
        grid_spec=pltpu.PrefetchScalarGridSpec(
            num_scalar_prefetch=0,
            grid=grid,
            in_specs=[
                pl.BlockSpec((tm_e, Cin_p), lambda i, k: (i, 0)),   # x row tile
                pl.BlockSpec((Cin_p, th_e), lambda i, k: (0, k)),   # W1 H-slice
                pl.BlockSpec((1, th_e), lambda i, k: (0, k)),       # b1 H-slice
                pl.BlockSpec((th_e, Cout_p), lambda i, k: (k, 0)),  # W2 H-slice
                pl.BlockSpec((1, Cout_p), lambda i, k: (0, 0)),     # b2
            ],
            out_specs=pl.BlockSpec((tm_e, Cout_p), lambda i, k: (i, 0)),
            scratch_shapes=[pltpu.VMEM((tm_e, Cout_p), jnp.float32)],
        ),
        compiler_params=pltpu.CompilerParams(
            dimension_semantics=("parallel", "arbitrary"),
            vmem_limit_bytes=vmem_limit,
        ),
    )(xb, w1p, b1p, w2p, b2p)

    return out[:M, :Cout]


# ---------------------------------------------------------------------------
# Pure-JAX reference (same precision policy)
# ---------------------------------------------------------------------------
def mlp_reference(x, w1, b1, w2, b2, dtype=jnp.bfloat16):
    xb, w1b, w2b = x.astype(dtype), w1.astype(dtype), w2.astype(dtype)
    h = jnp.dot(xb, w1b, preferred_element_type=jnp.float32) + b1.astype(jnp.float32)
    h = 0.5 * h * (1.0 + lax.erf(h * jnp.float32(_SQRT_HALF)))
    o = jnp.dot(h.astype(dtype), w2b, preferred_element_type=jnp.float32)
    return (o + b2.astype(jnp.float32)).astype(x.dtype)


def _make_params(key, c_in, hidden, c_out, b, n):
    kx, k1, kb1, k2, kb2 = jax.random.split(key, 5)
    x = jax.random.normal(kx, (b, n, c_in), dtype=jnp.float32)
    w1 = jax.random.normal(k1, (c_in, hidden), dtype=jnp.float32) * 0.02
    b1 = jax.random.normal(kb1, (hidden,), dtype=jnp.float32) * 0.02
    w2 = jax.random.normal(k2, (hidden, c_out), dtype=jnp.float32) * 0.02
    b2 = jax.random.normal(kb2, (c_out,), dtype=jnp.float32) * 0.02
    return x, w1, b1, w2, b2


if __name__ == "__main__":
    key = jax.random.PRNGKey(0)
    k_a, k_b = jax.random.split(key)

    # Case 1: lane-dense transformer-like (small) shapes.
    B, N, C_in, hidden, C_out = 2, 64, 128, 256, 128
    x, w1, b1, w2, b2 = _make_params(k_a, C_in, hidden, C_out, B, N)
    x_flat = x.reshape(B * N, C_in)
    params = prepare_mlp_params(w1, b1, w2, b2)          # one-time pad/cast
    out = mlp_pallas(x_flat, params).reshape(B, N, C_out)
    jax.block_until_ready(out)
    ref = mlp_reference(x_flat, w1, b1, w2, b2).reshape(B, N, C_out)
    assert jnp.allclose(out, ref, atol=2e-3, rtol=2e-2), "mismatch (dense case)"

    # Case 2: awkward shapes to exercise the padding / tail path.
    B2, N2, C_in2, hidden2, C_out2 = 2, 10, 48, 96, 48
    x2, w1_2, b1_2, w2_2, b2_2 = _make_params(k_b, C_in2, hidden2, C_out2, B2, N2)
    x2_flat = x2.reshape(B2 * N2, C_in2)
    params2 = prepare_mlp_params(w1_2, b1_2, w2_2, b2_2)
    out2 = mlp_pallas(x2_flat, params2).reshape(B2, N2, C_out2)
    jax.block_until_ready(out2)
    ref2 = mlp_reference(x2_flat, w1_2, b1_2, w2_2, b2_2).reshape(B2, N2, C_out2)
    assert jnp.allclose(out2, ref2, atol=2e-3, rtol=2e-2), "mismatch (padded case)"

    print("KERNEL_OK")
</pallas_src>

<mosaic_0001>
module attributes {stable_mosaic.version = 11 : i64} {
  func.func @_mlp_kernel(%arg0: i32, %arg1: i32, %arg2: memref<128x128xbf16, #tpu.memory_space<vmem>>, %arg3: memref<128x256xbf16, #tpu.memory_space<vmem>>, %arg4: memref<1x256xf32, #tpu.memory_space<vmem>>, %arg5: memref<256x128xbf16, #tpu.memory_space<vmem>>, %arg6: memref<1x128xf32, #tpu.memory_space<vmem>>, %arg7: memref<128x128xf32, #tpu.memory_space<vmem>>, %arg8: memref<128x128xf32, #tpu.memory_space<vmem>>) attributes {dimension_semantics = [#tpu.dimension_semantics<parallel>, #tpu.dimension_semantics<arbitrary>], iteration_bounds = array<i64: 1, 1>, scalar_prefetch = 0 : i64, scratch_operands = 1 : i64, tpu.core_type = #tpu.core_type<tc>, window_params = [{transform_indices = @transform_0, window_bounds = array<i64: 128, 128>}, {transform_indices = @transform_1, window_bounds = array<i64: 128, 256>}, {transform_indices = @transform_2, window_bounds = array<i64: 1, 256>}, {transform_indices = @transform_3, window_bounds = array<i64: 256, 128>}, {pipeline_mode = #tpu.pipeline_mode<synchronous>, transform_indices = @transform_4, window_bounds = array<i64: 1, 128>}, {transform_indices = @transform_5, window_bounds = array<i64: 128, 128>}]} {
    %c0_i32 = arith.constant 0 : i32
    %0 = arith.cmpi eq, %arg1, %c0_i32 : i32
    %1 = arith.extui %0 : i1 to i32
    %c0_i32_0 = arith.constant 0 : i32
    %2 = arith.cmpi ne, %1, %c0_i32_0 : i32
    scf.if %2 {
      %cst_18 = arith.constant 0.000000e+00 : f32
      %26 = vector.broadcast %cst_18 : f32 to vector<128x128xf32>
      %c0_19 = arith.constant 0 : index
      %c0_20 = arith.constant 0 : index
      %27 = vector.load %arg8[%c0_19, %c0_20] : memref<128x128xf32, #tpu.memory_space<vmem>>, vector<128x128xf32>
      tpu.vector_store %arg8[%c0_19, %c0_20], %26 {strides = array<i32>} : memref<128x128xf32, #tpu.memory_space<vmem>>, vector<128x128xf32>,
    } else {
    }
    %c0 = arith.constant 0 : index
    %c0_1 = arith.constant 0 : index
    %3 = vector.load %arg2[%c0, %c0_1] : memref<128x128xbf16, #tpu.memory_space<vmem>>, vector<128x128xbf16>
    %c0_2 = arith.constant 0 : index
    %c0_3 = arith.constant 0 : index
    %4 = vector.load %arg3[%c0_2, %c0_3] : memref<128x256xbf16, #tpu.memory_space<vmem>>, vector<128x256xbf16>
    %cst = arith.constant dense<0.000000e+00> : vector<128x256xf32>
    %5 = tpu.matmul %3, %4, %cst {dimension_numbers = #tpu.dot_dimension_numbers<[1], [0], [0], [1], [0, 0, 1, 1], [], []>} : vector<128x128xbf16>, vector<128x256xbf16>, vector<128x256xf32> -> vector<128x256xf32>
    %c0_4 = arith.constant 0 : index
    %c0_5 = arith.constant 0 : index
    %6 = vector.load %arg4[%c0_4, %c0_5] : memref<1x256xf32, #tpu.memory_space<vmem>>, vector<1x256xf32>
    %7 = vector.broadcast %6 : vector<1x256xf32> to vector<128x256xf32>
    %8 = arith.addf %5, %7 : vector<128x256xf32>
    %cst_6 = arith.constant 5.000000e-01 : f32
    %9 = vector.broadcast %cst_6 : f32 to vector<128x256xf32>
    %10 = arith.mulf %9, %8 : vector<128x256xf32>
    %cst_7 = arith.constant 0.707106769 : f32
    %11 = vector.broadcast %cst_7 : f32 to vector<128x256xf32>
    %12 = arith.mulf %8, %11 : vector<128x256xf32>
    %13 = math.erf %12 : vector<128x256xf32>
    %cst_8 = arith.constant 1.000000e+00 : f32
    %14 = vector.broadcast %cst_8 : f32 to vector<128x256xf32>
    %15 = arith.addf %14, %13 : vector<128x256xf32>
    %16 = arith.mulf %10, %15 : vector<128x256xf32>
    %c0_9 = arith.constant 0 : index
    %c0_10 = arith.constant 0 : index
    %17 = vector.load %arg8[%c0_9, %c0_10] : memref<128x128xf32, #tpu.memory_space<vmem>>, vector<128x128xf32>
    %18 = arith.truncf %16 : vector<128x256xf32> to vector<128x256xbf16>
    %c0_11 = arith.constant 0 : index
    %c0_12 = arith.constant 0 : index
    %19 = vector.load %arg5[%c0_11, %c0_12] : memref<256x128xbf16, #tpu.memory_space<vmem>>, vector<256x128xbf16>
    %cst_13 = arith.constant dense<0.000000e+00> : vector<128x128xf32>
    %20 = tpu.matmul %18, %19, %cst_13 {dimension_numbers = #tpu.dot_dimension_numbers<[1], [0], [0], [1], [0, 0, 1, 1], [], []>} : vector<128x256xbf16>, vector<256x128xbf16>, vector<128x128xf32> -> vector<128x128xf32>
    %21 = arith.addf %17, %20 : vector<128x128xf32>
    %c0_14 = arith.constant 0 : index
    %c0_15 = arith.constant 0 : index
    %22 = vector.load %arg8[%c0_14, %c0_15] : memref<128x128xf32, #tpu.memory_space<vmem>>, vector<128x128xf32>
    tpu.vector_store %arg8[%c0_14, %c0_15], %21 {strides = array<i32>} : memref<128x128xf32, #tpu.memory_space<vmem>>, vector<128x128xf32>,
    %c0_i32_16 = arith.constant 0 : i32
    %23 = arith.cmpi eq, %arg1, %c0_i32_16 : i32
    %24 = arith.extui %23 : i1 to i32
    %c0_i32_17 = arith.constant 0 : i32
    %25 = arith.cmpi ne, %24, %c0_i32_17 : i32
    scf.if %25 {
      %c0_18 = arith.constant 0 : index
      %c0_19 = arith.constant 0 : index
      %26 = vector.load %arg8[%c0_18, %c0_19] : memref<128x128xf32, #tpu.memory_space<vmem>>, vector<128x128xf32>
      %c0_20 = arith.constant 0 : index
      %c0_21 = arith.constant 0 : index
      %27 = vector.load %arg6[%c0_20, %c0_21] : memref<1x128xf32, #tpu.memory_space<vmem>>, vector<1x128xf32>
      %28 = vector.broadcast %27 : vector<1x128xf32> to vector<128x128xf32>
      %29 = arith.addf %26, %28 : vector<128x128xf32>
      %c0_22 = arith.constant 0 : index
      %c0_23 = arith.constant 0 : index
      %30 = vector.load %arg7[%c0_22, %c0_23] : memref<128x128xf32, #tpu.memory_space<vmem>>, vector<128x128xf32>
      tpu.vector_store %arg7[%c0_22, %c0_23], %29 {strides = array<i32>} : memref<128x128xf32, #tpu.memory_space<vmem>>, vector<128x128xf32>,
    } else {
    }
    return
  }
  func.func @transform_0(%arg0: i32, %arg1: i32) -> (i32, i32) {
    %c0_i32 = arith.constant 0 : i32
    %c0_i32_0 = arith.constant 0 : i32
    return %arg0, %c0_i32 : i32, i32
  }
  func.func @transform_1(%arg0: i32, %arg1: i32) -> (i32, i32) {
    %c0_i32 = arith.constant 0 : i32
    %c0_i32_0 = arith.constant 0 : i32
    return %c0_i32, %arg1 : i32, i32
  }
  func.func @transform_2(%arg0: i32, %arg1: i32) -> (i32, i32) {
    %c0_i32 = arith.constant 0 : i32
    %c0_i32_0 = arith.constant 0 : i32
    return %c0_i32, %arg1 : i32, i32
  }
  func.func @transform_3(%arg0: i32, %arg1: i32) -> (i32, i32) {
    %c0_i32 = arith.constant 0 : i32
    %c0_i32_0 = arith.constant 0 : i32
    return %arg1, %c0_i32 : i32, i32
  }
  func.func @transform_4(%arg0: i32, %arg1: i32) -> (i32, i32) {
    %c0_i32 = arith.constant 0 : i32
    %c0_i32_0 = arith.constant 0 : i32
    %c0_i32_1 = arith.constant 0 : i32
    return %c0_i32, %c0_i32_0 : i32, i32
  }
  func.func @transform_5(%arg0: i32, %arg1: i32) -> (i32, i32) {
    %c0_i32 = arith.constant 0 : i32
    %c0_i32_0 = arith.constant 0 : i32
    return %arg0, %c0_i32 : i32, i32
  }
}

</mosaic_0001>

<llo_original>
// kernel: tpu_custom_call.1
$region0: #{tpu_custom_call.1}
  #allocation0 [shape = 'u32[]', space=smem, size = 0x4, offset = 0x4, fixed_abs, tag = 'smem constant byte address 0x4 - core index']
  #allocation1 [shape = 'u32[144,128]{1,0:T(1,128)}', space=vmem, size = 0x12000, scoped, tag = 'internal scratch']
  #allocation2 [shape = 'f32[128,128]{1,0:T(8,128)}', space=vmem, size = 0x10000, scoped, tag = 'scratch operand']
  %s0 = inlined_call_operand.hbm [shape: bf16[128,128], index: 0, kind: input, shape index: {}]
  %s1 = inlined_call_operand.hbm [shape: bf16[128,256], index: 1, kind: input, shape index: {}]
  %s2 = inlined_call_operand.vmem [shape: f32[1,256], index: 2, kind: input, shape index: {}]
  %s3 = inlined_call_operand.hbm [shape: bf16[256,128], index: 3, kind: input, shape index: {}]
  %s4 = inlined_call_operand.vmem [shape: f32[1,128], index: 4, kind: input, shape index: {}]
  %s5 = inlined_call_operand.hbm [shape: f32[128,128], index: 5, kind: output, shape index: {}]
  %s6 = sld [smem:[#allocation0]]
  $region50: #{tpu_custom_call.1} parent=0
    _
  %s8 = ssub.s32 1, %s6
  %s9 = scalar_select 0, %s8, %s6
  $region1: #{tpu_custom_call.1} parent=0
    #allocation3 [shape = 'u8[32768]{0}', space=vmem, size = 0x8000, scoped, tag = 'input window, operand 0, single buffered']
    #allocation4 [shape = 's32[1]{0}', space=sflag, size = 0x4, scoped, tag = 'scoped memory for tpu_custom_call.1']
    #allocation5 [shape = 's32[1]{0}', space=sflag, size = 0x4, scoped, tag = 'scoped memory for tpu_custom_call.1']
    #allocation6 [shape = 'u8[65536]{0}', space=vmem, size = 0x10000, scoped, tag = 'input window, operand 1, single buffered']
    #allocation7 [shape = 's32[1]{0}', space=sflag, size = 0x4, scoped, tag = 'scoped memory for tpu_custom_call.1']
    #allocation8 [shape = 'u8[65536]{0}', space=vmem, size = 0x10000, scoped, tag = 'input window, operand 3, single buffered']
    #allocation9 [shape = 'u8[65536]{0}', space=vmem, size = 0x10000, scoped, tag = 'output window, operand 0, single buffered']
    %10 = vsyncpa [#allocation4], 0
    %11 = vsyncpa [#allocation7], 0
    %12 = vsyncpa [#allocation5], 0
    // Predicated region
    $region2: #{tpu_custom_call.1} parent=1 // pred_check
      _
    $region3: #{tpu_custom_call.1} parent=1 // pred_check_branch
      %14 = sbr.rel (0) target = $region5
    $region4: #{tpu_custom_call.1} parent=1 // pred_region
      %s16 = ssub.s32 1024, 1024
      %17 = vsyncadd [#allocation4], %s16
      %s18 = sshll.u32 [#allocation3], 4
      %s19 = int_to_ptr.vmem [resolvable:$true] %s18
      %24 = dma.hbm_to_vmem [thread:$0]  %s0, 1024, %s19, [#allocation4], 64, 64, 4
    $region5: #{tpu_custom_call.1} parent=1 // pred_fallthru
      _
    // Predicated region
    $region6: #{tpu_custom_call.1} parent=1 // pred_check
      _
    $region7: #{tpu_custom_call.1} parent=1 // pred_check_branch
      %26 = sbr.rel (0) target = $region9
    $region8: #{tpu_custom_call.1} parent=1 // pred_region
      %s28 = ssub.s32 2048, 2048
      %29 = vsyncadd [#allocation7], %s28
      %s30 = sshll.u32 [#allocation6], 4
      %s31 = int_to_ptr.vmem [resolvable:$true] %s30
      %36 = dma.hbm_to_vmem [thread:$0]  %s1, 2048, %s31, [#allocation7], 128, 128, 8
    $region9: #{tpu_custom_call.1} parent=1 // pred_fallthru
      _
    // Predicated region
    $region10: #{tpu_custom_call.1} parent=1 // pred_check
      _
    $region11: #{tpu_custom_call.1} parent=1 // pred_check_branch
      %38 = sbr.rel (0) target = $region13
    $region12: #{tpu_custom_call.1} parent=1 // pred_region
      _
    $region13: #{tpu_custom_call.1} parent=1 // pred_fallthru
      _
    // Predicated region
    $region14: #{tpu_custom_call.1} parent=1 // pred_check
      _
    $region15: #{tpu_custom_call.1} parent=1 // pred_check_branch
      %40 = sbr.rel (0) target = $region17
    $region16: #{tpu_custom_call.1} parent=1 // pred_region
      %s42 = ssub.s32 2048, 2048
      %43 = vsyncadd [#allocation7], %s42
      %s44 = sshll.u32 [#allocation8], 4
      %s45 = int_to_ptr.vmem [resolvable:$true] %s44
      %50 = dma.hbm_to_vmem [thread:$0]  %s3, 2048, %s45, [#allocation7], 64, 64, 4
    $region17: #{tpu_custom_call.1} parent=1 // pred_fallthru
      _
    // Predicated region
    $region18: #{tpu_custom_call.1} parent=1 // pred_check
      _
    $region19: #{tpu_custom_call.1} parent=1 // pred_check_branch
      %52 = sbr.rel (0) target = $region21
    $region20: #{tpu_custom_call.1} parent=1 // pred_region
      _
    $region21: #{tpu_custom_call.1} parent=1 // pred_fallthru
      _
    // Predicated region
    $region22: #{tpu_custom_call.1} parent=1 // pred_check
      _
    $region23: #{tpu_custom_call.1} parent=1 // pred_check_branch
      %54 = sbr.rel (0) target = $region25
    $region24: #{tpu_custom_call.1} parent=1 // pred_region
      %55 = dma.done [#allocation4], 1024
    $region25: #{tpu_custom_call.1} parent=1 // pred_fallthru
      _
    // Predicated region
    $region26: #{tpu_custom_call.1} parent=1 // pred_check
      _
    $region27: #{tpu_custom_call.1} parent=1 // pred_check_branch
      %57 = sbr.rel (0) target = $region29
    $region28: #{tpu_custom_call.1} parent=1 // pred_region
      %58 = dma.done [#allocation7], 2048
    $region29: #{tpu_custom_call.1} parent=1 // pred_fallthru
      _
    // Predicated region
    $region30: #{tpu_custom_call.1} parent=1 // pred_check
      _
    $region31: #{tpu_custom_call.1} parent=1 // pred_check_branch
      %60 = sbr.rel (0) target = $region33
    $region32: #{tpu_custom_call.1} parent=1 // pred_region
      %61 = dma.done [#allocation7], 2048
    $region33: #{tpu_custom_call.1} parent=1 // pred_fallthru
      _
    %p63 = scmp.eq.s32.totalorder 0, 0
    // Predicated region
    $region34: #{tpu_custom_call.1} parent=1 // pred_check
      %p64 = pneg %p63
    $region35: #{tpu_custom_call.1} parent=1 // pred_check_branch
      %66 = sbr.rel (%p64) target = $region37
    $region36: #{tpu_custom_call.1} parent=1 // pred_region
      %67 = vst [vmem:[#allocation2] sm:$0xff] 0.0
      %68 = vst [vmem:[#allocation2 + $0x8] sm:$0xff] 0.0
      %69 = vst [vmem:[#allocation2 + $0x10] sm:$0xff] 0.0
      %70 = vst [vmem:[#allocation2 + $0x18] sm:$0xff] 0.0
      %71 = vst [vmem:[#allocation2 + $0x20] sm:$0xff] 0.0
      %72 = vst [vmem:[#allocation2 + $0x28] sm:$0xff] 0.0
      %73 = vst [vmem:[#allocation2 + $0x30] sm:$0xff] 0.0
      %74 = vst [vmem:[#allocation2 + $0x38] sm:$0xff] 0.0
      %75 = vst [vmem:[#allocation2 + $0x40] sm:$0xff] 0.0
      %76 = vst [vmem:[#allocation2 + $0x48] sm:$0xff] 0.0
      %77 = vst [vmem:[#allocation2 + $0x50] sm:$0xff] 0.0
      %78 = vst [vmem:[#allocation2 + $0x58] sm:$0xff] 0.0
      %79 = vst [vmem:[#allocation2 + $0x60] sm:$0xff] 0.0
      %80 = vst [vmem:[#allocation2 + $0x68] sm:$0xff] 0.0
      %81 = vst [vmem:[#allocation2 + $0x70] sm:$0xff] 0.0
      %82 = vst [vmem:[#allocation2 + $0x78] sm:$0xff] 0.0
    $region37: #{tpu_custom_call.1} parent=1 // pred_fallthru
      _
    %v83 = vld [vmem:[#allocation3] sm:$0xf]
    %v84 = vld [vmem:[#allocation3 + $0x4] sm:$0xf]
    %v85 = vld [vmem:[#allocation3 + $0x8] sm:$0xf]
    %v86 = vld [vmem:[#allocation3 + $0xc] sm:$0xf]
    %v87 = vld [vmem:[#allocation3 + $0x10] sm:$0xf]
    %v88 = vld [vmem:[#allocation3 + $0x14] sm:$0xf]
    %v89 = vld [vmem:[#allocation3 + $0x18] sm:$0xf]
    %v90 = vld [vmem:[#allocation3 + $0x1c] sm:$0xf]
    %v91 = vld [vmem:[#allocation3 + $0x20] sm:$0xf]
    %v92 = vld [vmem:[#allocation3 + $0x24] sm:$0xf]
    %v93 = vld [vmem:[#allocation3 + $0x28] sm:$0xf]
    %v94 = vld [vmem:[#allocation3 + $0x2c] sm:$0xf]
    %v95 = vld [vmem:[#allocation3 + $0x30] sm:$0xf]
    %v96 = vld [vmem:[#allocation3 + $0x34] sm:$0xf]
    %v97 = vld [vmem:[#allocation3 + $0x38] sm:$0xf]
    %v98 = vld [vmem:[#allocation3 + $0x3c] sm:$0xf]
    %v99 = vld [vmem:[#allocation6] sm:$0xff]
    %v100 = vld [vmem:[#allocation6 + $0x8] sm:$0xff]
    %v101 = vld [vmem:[#allocation6 + $0x10] sm:$0xff]
    %v102 = vld [vmem:[#allocation6 + $0x18] sm:$0xff]
    %v103 = vld [vmem:[#allocation6 + $0x20] sm:$0xff]
    %v104 = vld [vmem:[#allocation6 + $0x28] sm:$0xff]
    %v105 = vld [vmem:[#allocation6 + $0x30] sm:$0xff]
    %v106 = vld [vmem:[#allocation6 + $0x38] sm:$0xff]
    %v107 = vld [vmem:[#allocation6 + $0x40] sm:$0xff]
    %v108 = vld [vmem:[#allocation6 + $0x48] sm:$0xff]
    %v109 = vld [vmem:[#allocation6 + $0x50] sm:$0xff]
    %v110 = vld [vmem:[#allocation6 + $0x58] sm:$0xff]
    %v111 = vld [vmem:[#allocation6 + $0x60] sm:$0xff]
    %v112 = vld [vmem:[#allocation6 + $0x68] sm:$0xff]
    %v113 = vld [vmem:[#allocation6 + $0x70] sm:$0xff]
    %v114 = vld [vmem:[#allocation6 + $0x78] sm:$0xff]
    %v115 = vld [vmem:[%s2] sm:$0x3]
    %v117 = vlaneseq
    %v118 = vshrl.u32 %v117, 7
    %v119 = vsub.s32 0, %v118
    %v120 = vrot.slane %v115, %v119
    %v121 = vlaneseq
    %v122 = vshrl.u32 %v121, 7
    %v123 = vsub.s32 1, %v122
    %v124 = vrot.slane %v115, %v123
    %v143 = vunpack.c.l.b16 %v83
    %v144 = vunpack.c.l.b16 %v84
    %v145 = vunpack.c.l.b16 %v85
    %v146 = vunpack.c.l.b16 %v86
    %v147 = vunpack.c.l.b16 %v87
    %v148 = vunpack.c.l.b16 %v88
    %v149 = vunpack.c.l.b16 %v89
    %v150 = vunpack.c.l.b16 %v90
    %v151 = vunpack.c.l.b16 %v91
    %v152 = vunpack.c.l.b16 %v92
    %v153 = vunpack.c.l.b16 %v93
    %v154 = vunpack.c.l.b16 %v94
    %v155 = vunpack.c.l.b16 %v95
    %v156 = vunpack.c.l.b16 %v96
    %v157 = vunpack.c.l.b16 %v97
    %v158 = vunpack.c.l.b16 %v98
    %v159 = vpack.c.b16 %v144, %v143
    %v160 = vpack.c.b16 %v146, %v145
    %v161 = vpack.c.b16 %v148, %v147
    %v162 = vpack.c.b16 %v150, %v149
    %v163 = vpack.c.b16 %v152, %v151
    %v164 = vpack.c.b16 %v154, %v153
    %v165 = vpack.c.b16 %v156, %v155
    %v166 = vpack.c.b16 %v158, %v157
    %v191 = vunpack.c.l.b16 %v99
    %v192 = vunpack.c.h.b16 %v99
    %v193 = vunpack.c.l.b16 %v100
    %v194 = vunpack.c.h.b16 %v100
    %v195 = vunpack.c.l.b16 %v101
    %v196 = vunpack.c.h.b16 %v101
    %v197 = vunpack.c.l.b16 %v102
    %v198 = vunpack.c.h.b16 %v102
    %v199 = vunpack.c.l.b16 %v103
    %v200 = vunpack.c.h.b16 %v103
    %v201 = vunpack.c.l.b16 %v104
    %v202 = vunpack.c.h.b16 %v104
    %v203 = vunpack.c.l.b16 %v105
    %v204 = vunpack.c.h.b16 %v105
    %v205 = vunpack.c.l.b16 %v106
    %v206 = vunpack.c.h.b16 %v106
    %v207 = vunpack.c.l.b16 %v107
    %v208 = vunpack.c.h.b16 %v107
    %v209 = vunpack.c.l.b16 %v108
    %v210 = vunpack.c.h.b16 %v108
    %v211 = vunpack.c.l.b16 %v109
    %v212 = vunpack.c.h.b16 %v109
    %v213 = vunpack.c.l.b16 %v110
    %v214 = vunpack.c.h.b16 %v110
    %v215 = vunpack.c.l.b16 %v111
    %v216 = vunpack.c.h.b16 %v111
    %v217 = vunpack.c.l.b16 %v112
    %v218 = vunpack.c.h.b16 %v112
    %v219 = vunpack.c.l.b16 %v113
    %v220 = vunpack.c.h.b16 %v113
    %v221 = vunpack.c.l.b16 %v114
    %v222 = vunpack.c.h.b16 %v114
    %v223 = vpack.c.b16 %v193, %v191
    %v224 = vpack.c.b16 %v194, %v192
    %v225 = vpack.c.b16 %v197, %v195
    %v226 = vpack.c.b16 %v198, %v196
    %v227 = vpack.c.b16 %v201, %v199
    %v228 = vpack.c.b16 %v202, %v200
    %v229 = vpack.c.b16 %v205, %v203
    %v230 = vpack.c.b16 %v206, %v204
    %v231 = vpack.c.b16 %v209, %v207
    %v232 = vpack.c.b16 %v210, %v208
    %v233 = vpack.c.b16 %v213, %v211
    %v234 = vpack.c.b16 %v214, %v212
    %v235 = vpack.c.b16 %v217, %v215
    %v236 = vpack.c.b16 %v218, %v216
    %v237 = vpack.c.b16 %v221, %v219
    %v238 = vpack.c.b16 %v222, %v220
    %255 = vmatprep.subr.bf16.mxu0 %v224
    %256 = vmatpush1.bf16.msra.mxu0 %v223
    %257 = vmatprep.subr.bf16.mxu0 %v226
    %258 = vmatpush1.bf16.msra.mxu0 %v225
    %259 = vmatprep.subr.bf16.mxu0 %v228
    %260 = vmatpush1.bf16.msra.mxu0 %v227
    %261 = vmatprep.subr.bf16.mxu0 %v230
    %262 = vmatpush1.bf16.msra.mxu0 %v229
    %263 = vmatprep.subr.bf16.mxu0 %v232
    %264 = vmatpush1.bf16.msra.mxu0 %v231
    %265 = vmatprep.subr.bf16.mxu0 %v234
    %266 = vmatpush1.bf16.msra.mxu0 %v233
    %267 = vmatprep.subr.bf16.mxu0 %v236
    %268 = vmatpush1.bf16.msra.mxu0 %v235
    %269 = vmatprep.subr.bf16.mxu0 %v238
    %270 = vmatpush1.bf16.msra.mxu0 %v237
    %271 = vmatprep.subr.bf16.mxu0 0
    %272 = vmatpush1.bf16.msra.mxu0 0
    %273 = vmatprep.subr.bf16.mxu0 0
    %274 = vmatpush1.bf16.msra.mxu0 0
    %275 = vmatprep.subr.bf16.mxu0 0
    %276 = vmatpush1.bf16.msra.mxu0 0
    %277 = vmatprep.subr.bf16.mxu0 0
    %278 = vmatpush1.bf16.msra.mxu0 0
    %279 = vmatprep.subr.bf16.mxu0 0
    %280 = vmatpush1.bf16.msra.mxu0 0
    %281 = vmatprep.subr.bf16.mxu0 0
    %282 = vmatpush1.bf16.msra.mxu0 0
    %283 = vmatprep.subr.bf16.mxu0 0
    %284 = vmatpush1.bf16.msra.mxu0 0
    %285 = vmatprep.subr.bf16.mxu0 0
    %286 = vmatpush1.bf16.msra.mxu0 0
    %287 = vmatprep.mubr.bf16.mxu0 0
    %288 = vmatmul.mubr.bf16.gmra.mrb[0].mxu0 %v159
    %v289 = vpop.f32.mrb[0].mxu0
    %v290 = vadd.f32 %v120, %v289
    %v291 = vpop.f32.mrb[0].mxu0
    %v292 = vadd.f32 %v124, %v291
    %v293 = vpop.f32.mrb[0].mxu0
    %v294 = vadd.f32 %v120, %v293
    %v295 = vpop.f32.mrb[0].mxu0
    %v296 = vadd.f32 %v124, %v295
    %297 = vmatprep.mubr.bf16.mxu0 0
    %298 = vmatmul.mubr.bf16.gmra.mrb[0].mxu0 %v160
    %v299 = vpop.f32.mrb[0].mxu0
    %v300 = vadd.f32 %v120, %v299
    %v301 = vpop.f32.mrb[0].mxu0
    %v302 = vadd.f32 %v124, %v301
    %v303 = vpop.f32.mrb[0].mxu0
    %v304 = vadd.f32 %v120, %v303
    %v305 = vpop.f32.mrb[0].mxu0
    %v306 = vadd.f32 %v124, %v305
    %307 = vmatprep.mubr.bf16.mxu0 0
    %308 = vmatmul.mubr.bf16.gmra.mrb[0].mxu0 %v161
    %v309 = vpop.f32.mrb[0].mxu0
    %v310 = vadd.f32 %v120, %v309
    %v311 = vpop.f32.mrb[0].mxu0
    %v312 = vadd.f32 %v124, %v311
    %v313 = vpop.f32.mrb[0].mxu0
    %v314 = vadd.f32 %v120, %v313
    %v315 = vpop.f32.mrb[0].mxu0
    %v316 = vadd.f32 %v124, %v315
    %317 = vmatprep.mubr.bf16.mxu0 0
    %318 = vmatmul.mubr.bf16.gmra.mrb[0].mxu0 %v162
    %v319 = vpop.f32.mrb[0].mxu0
    %v320 = vadd.f32 %v120, %v319
    %v321 = vpop.f32.mrb[0].mxu0
    %v322 = vadd.f32 %v124, %v321
    %v323 = vpop.f32.mrb[0].mxu0
    %v324 = vadd.f32 %v120, %v323
    %v325 = vpop.f32.mrb[0].mxu0
    %v326 = vadd.f32 %v124, %v325
    %327 = vmatprep.mubr.bf16.mxu0 0
    %328 = vmatmul.mubr.bf16.gmra.mrb[0].mxu0 %v163
    %v329 = vpop.f32.mrb[0].mxu0
    %v330 = vadd.f32 %v120, %v329
    %v331 = vpop.f32.mrb[0].mxu0
    %v332 = vadd.f32 %v124, %v331
    %v333 = vpop.f32.mrb[0].mxu0
    %v334 = vadd.f32 %v120, %v333
    %v335 = vpop.f32.mrb[0].mxu0
    %v336 = vadd.f32 %v124, %v335
    %337 = vmatprep.mubr.bf16.mxu0 0
    %338 = vmatmul.mubr.bf16.gmra.mrb[0].mxu0 %v164
    %v339 = vpop.f32.mrb[0].mxu0
    %v340 = vadd.f32 %v120, %v339
    %v341 = vpop.f32.mrb[0].mxu0
    %v342 = vadd.f32 %v124, %v341
    %v343 = vpop.f32.mrb[0].mxu0
    %v344 = vadd.f32 %v120, %v343
    %v345 = vpop.f32.mrb[0].mxu0
    %v346 = vadd.f32 %v124, %v345
    %347 = vmatprep.mubr.bf16.mxu0 0
    %348 = vmatmul.mubr.bf16.gmra.mrb[0].mxu0 %v165
    %v349 = vpop.f32.mrb[0].mxu0
    %v350 = vadd.f32 %v120, %v349
    %v351 = vpop.f32.mrb[0].mxu0
    %v352 = vadd.f32 %v124, %v351
    %v353 = vpop.f32.mrb[0].mxu0
    %v354 = vadd.f32 %v120, %v353
    %v355 = vpop.f32.mrb[0].mxu0
    %v356 = vadd.f32 %v124, %v355
    %357 = vmatprep.mubr.bf16.mxu0 0
    %358 = vmatmul.mubr.bf16.gmra.mrb[0].mxu0 %v166
    %v359 = vpop.f32.mrb[0].mxu0
    %v360 = vadd.f32 %v120, %v359
    %v361 = vpop.f32.mrb[0].mxu0
    %v362 = vadd.f32 %v124, %v361
    %v363 = vpop.f32.mrb[0].mxu0
    %v364 = vadd.f32 %v120, %v363
    %v365 = vpop.f32.mrb[0].mxu0
    %v366 = vadd.f32 %v124, %v365
    %367 = vdwg.mxu0
    %v368 = vmul.f32 %v290, 0.5
    %v369 = vmul.f32 %v292, 0.5
    %v370 = vmul.f32 %v294, 0.5
    %v371 = vmul.f32 %v296, 0.5
    %v372 = vmul.f32 %v300, 0.5
    %v373 = vmul.f32 %v302, 0.5
    %v374 = vmul.f32 %v304, 0.5
    %v375 = vmul.f32 %v306, 0.5
    %v376 = vmul.f32 %v310, 0.5
    %v377 = vmul.f32 %v312, 0.5
    %v378 = vmul.f32 %v314, 0.5
    %v379 = vmul.f32 %v316, 0.5
    %v380 = vmul.f32 %v320, 0.5
    %v381 = vmul.f32 %v322, 0.5
    %v382 = vmul.f32 %v324, 0.5
    %v383 = vmul.f32 %v326, 0.5
    %v384 = vmul.f32 %v330, 0.5
    %v385 = vmul.f32 %v332, 0.5
    %v386 = vmul.f32 %v334, 0.5
    %v387 = vmul.f32 %v336, 0.5
    %v388 = vmul.f32 %v340, 0.5
    %v389 = vmul.f32 %v342, 0.5
    %v390 = vmul.f32 %v344, 0.5
    %v391 = vmul.f32 %v346, 0.5
    %v392 = vmul.f32 %v350, 0.5
    %v393 = vmul.f32 %v352, 0.5
    %v394 = vmul.f32 %v354, 0.5
    %v395 = vmul.f32 %v356, 0.5
    %v396 = vmul.f32 %v360, 0.5
    %v397 = vmul.f32 %v362, 0.5
    %v398 = vmul.f32 %v364, 0.5
    %v399 = vmul.f32 %v366, 0.5
    %v400 = vmul.f32 %v290, 0.70710677
    %v401 = vmul.f32 %v292, 0.70710677
    %v402 = vmul.f32 %v294, 0.70710677
    %v403 = vmul.f32 %v296, 0.70710677
    %v404 = vmul.f32 %v300, 0.70710677
    %v405 = vmul.f32 %v302, 0.70710677
    %v406 = vmul.f32 %v304, 0.70710677
    %v407 = vmul.f32 %v306, 0.70710677
    %v408 = vmul.f32 %v310, 0.70710677
    %v409 = vmul.f32 %v312, 0.70710677
    %v410 = vmul.f32 %v314, 0.70710677
    %v411 = vmul.f32 %v316, 0.70710677
    %v412 = vmul.f32 %v320, 0.70710677
    %v413 = vmul.f32 %v322, 0.70710677
    %v414 = vmul.f32 %v324, 0.70710677
    %v415 = vmul.f32 %v326, 0.70710677
    %v416 = vmul.f32 %v330, 0.70710677
    %v417 = vmul.f32 %v332, 0.70710677
    %v418 = vmul.f32 %v334, 0.70710677
    %v419 = vmul.f32 %v336, 0.70710677
    %v420 = vmul.f32 %v340, 0.70710677
    %v421 = vmul.f32 %v342, 0.70710677
    %v422 = vmul.f32 %v344, 0.70710677
    %v423 = vmul.f32 %v346, 0.70710677
    %v424 = vmul.f32 %v350, 0.70710677
    %v425 = vmul.f32 %v352, 0.70710677
    %v426 = vmul.f32 %v354, 0.70710677
    %v427 = vmul.f32 %v356, 0.70710677
    %v428 = vmul.f32 %v360, 0.70710677
    %v429 = vmul.f32 %v362, 0.70710677
    %v430 = vmul.f32 %v364, 0.70710677
    %v431 = vmul.f32 %v366, 0.70710677
    %v432 = verf.f32.pop %v400
    %v433 = verf.f32.pop %v401
    %v434 = verf.f32.pop %v402
    %v435 = verf.f32.pop %v403
    %v436 = verf.f32.pop %v404
    %v437 = verf.f32.pop %v405
    %v438 = verf.f32.pop %v406
    %v439 = verf.f32.pop %v407
    %v440 = verf.f32.pop %v408
    %v441 = verf.f32.pop %v409
    %v442 = verf.f32.pop %v410
    %v443 = verf.f32.pop %v411
    %v444 = verf.f32.pop %v412
    %v445 = verf.f32.pop %v413
    %v446 = verf.f32.pop %v414
    %v447 = verf.f32.pop %v415
    %v448 = verf.f32.pop %v416
    %v449 = verf.f32.pop %v417
    %v450 = verf.f32.pop %v418
    %v451 = verf.f32.pop %v419
    %v452 = verf.f32.pop %v420
    %v453 = verf.f32.pop %v421
    %v454 = verf.f32.pop %v422
    %v455 = verf.f32.pop %v423
    %v456 = verf.f32.pop %v424
    %v457 = verf.f32.pop %v425
    %v458 = verf.f32.pop %v426
    %v459 = verf.f32.pop %v427
    %v460 = verf.f32.pop %v428
    %v461 = verf.f32.pop %v429
    %v462 = verf.f32.pop %v430
    %v463 = verf.f32.pop %v431
    %v464 = vadd.f32 %v432, 1.0
    %v465 = vadd.f32 %v433, 1.0
    %v466 = vadd.f32 %v434, 1.0
    %v467 = vadd.f32 %v435, 1.0
    %v468 = vadd.f32 %v436, 1.0
    %v469 = vadd.f32 %v437, 1.0
    %v470 = vadd.f32 %v438, 1.0
    %v471 = vadd.f32 %v439, 1.0
    %v472 = vadd.f32 %v440, 1.0
    %v473 = vadd.f32 %v441, 1.0
    %v474 = vadd.f32 %v442, 1.0
    %v475 = vadd.f32 %v443, 1.0
    %v476 = vadd.f32 %v444, 1.0
    %v477 = vadd.f32 %v445, 1.0
    %v478 = vadd.f32 %v446, 1.0
    %v479 = vadd.f32 %v447, 1.0
    %v480 = vadd.f32 %v448, 1.0
    %v481 = vadd.f32 %v449, 1.0
    %v482 = vadd.f32 %v450, 1.0
    %v483 = vadd.f32 %v451, 1.0
    %v484 = vadd.f32 %v452, 1.0
    %v485 = vadd.f32 %v453, 1.0
    %v486 = vadd.f32 %v454, 1.0
    %v487 = vadd.f32 %v455, 1.0
    %v488 = vadd.f32 %v456, 1.0
    %v489 = vadd.f32 %v457, 1.0
    %v490 = vadd.f32 %v458, 1.0
    %v491 = vadd.f32 %v459, 1.0
    %v492 = vadd.f32 %v460, 1.0
    %v493 = vadd.f32 %v461, 1.0
    %v494 = vadd.f32 %v462, 1.0
    %v495 = vadd.f32 %v463, 1.0
    %v496 = vmul.f32 %v368, %v464
    %v497 = vmul.f32 %v369, %v465
    %v498 = vmul.f32 %v370, %v466
    %v499 = vmul.f32 %v371, %v467
    %v500 = vmul.f32 %v372, %v468
    %v501 = vmul.f32 %v373, %v469
    %v502 = vmul.f32 %v374, %v470
    %v503 = vmul.f32 %v375, %v471
    %v504 = vmul.f32 %v376, %v472
    %v505 = vmul.f32 %v377, %v473
    %v506 = vmul.f32 %v378, %v474
    %v507 = vmul.f32 %v379, %v475
    %v508 = vmul.f32 %v380, %v476
    %v509 = vmul.f32 %v381, %v477
    %v510 = vmul.f32 %v382, %v478
    %v511 = vmul.f32 %v383, %v479
    %v512 = vmul.f32 %v384, %v480
    %v513 = vmul.f32 %v385, %v481
    %v514 = vmul.f32 %v386, %v482
    %v515 = vmul.f32 %v387, %v483
    %v516 = vmul.f32 %v388, %v484
    %v517 = vmul.f32 %v389, %v485
    %v518 = vmul.f32 %v390, %v486
    %v519 = vmul.f32 %v391, %v487
    %v520 = vmul.f32 %v392, %v488
    %v521 = vmul.f32 %v393, %v489
    %v522 = vmul.f32 %v394, %v490
    %v523 = vmul.f32 %v395, %v491
    %v524 = vmul.f32 %v396, %v492
    %v525 = vmul.f32 %v397, %v493
    %v526 = vmul.f32 %v398, %v494
    %v527 = vmul.f32 %v399, %v495
    %v528 = vld [vmem:[#allocation2] sm:$0xff]
    %v529 = vld [vmem:[#allocation2 + $0x8] sm:$0xff]
    %v530 = vld [vmem:[#allocation2 + $0x10] sm:$0xff]
    %v531 = vld [vmem:[#allocation2 + $0x18] sm:$0xff]
    %v532 = vld [vmem:[#allocation2 + $0x20] sm:$0xff]
    %v533 = vld [vmem:[#allocation2 + $0x28] sm:$0xff]
    %v534 = vld [vmem:[#allocation2 + $0x30] sm:$0xff]
    %v535 = vld [vmem:[#allocation2 + $0x38] sm:$0xff]
    %v536 = vld [vmem:[#allocation2 + $0x40] sm:$0xff]
    %v537 = vld [vmem:[#allocation2 + $0x48] sm:$0xff]
    %v538 = vld [vmem:[#allocation2 + $0x50] sm:$0xff]
    %v539 = vld [vmem:[#allocation2 + $0x58] sm:$0xff]
    %v540 = vld [vmem:[#allocation2 + $0x60] sm:$0xff]
    %v541 = vld [vmem:[#allocation2 + $0x68] sm:$0xff]
    %v542 = vld [vmem:[#allocation2 + $0x70] sm:$0xff]
    %v543 = vld [vmem:[#allocation2 + $0x78] sm:$0xff]
    %v544 = vpack.c.bf16 %v498, %v496
    %v545 = vpack.c.bf16 %v499, %v497
    %v546 = vpack.c.bf16 %v502, %v500
    %v547 = vpack.c.bf16 %v503, %v501
    %v548 = vpack.c.bf16 %v506, %v504
    %v549 = vpack.c.bf16 %v507, %v505
    %v550 = vpack.c.bf16 %v510, %v508
    %v551 = vpack.c.bf16 %v511, %v509
    %v552 = vpack.c.bf16 %v514, %v512
    %v553 = vpack.c.bf16 %v515, %v513
    %v554 = vpack.c.bf16 %v518, %v516
    %v555 = vpack.c.bf16 %v519, %v517
    %v556 = vpack.c.bf16 %v522, %v520
    %v557 = vpack.c.bf16 %v523, %v521
    %v558 = vpack.c.bf16 %v526, %v524
    %v559 = vpack.c.bf16 %v527, %v525
    %v560 = vld [vmem:[#allocation8] sm:$0xf]
    %v561 = vld [vmem:[#allocation8 + $0x4] sm:$0xf]
    %v562 = vld [vmem:[#allocation8 + $0x8] sm:$0xf]
    %v563 = vld [vmem:[#allocation8 + $0xc] sm:$0xf]
    %v564 = vld [vmem:[#allocation8 + $0x10] sm:$0xf]
    %v565 = vld [vmem:[#allocation8 + $0x14] sm:$0xf]
    %v566 = vld [vmem:[#allocation8 + $0x18] sm:$0xf]
    %v567 = vld [vmem:[#allocation8 + $0x1c] sm:$0xf]
    %v568 = vld [vmem:[#allocation8 + $0x20] sm:$0xf]
    %v569 = vld [vmem:[#allocation8 + $0x24] sm:$0xf]
    %v570 = vld [vmem:[#allocation8 + $0x28] sm:$0xf]
    %v571 = vld [vmem:[#allocation8 + $0x2c] sm:$0xf]
    %v572 = vld [vmem:[#allocation8 + $0x30] sm:$0xf]
    %v573 = vld [vmem:[#allocation8 + $0x34] sm:$0xf]
    %v574 = vld [vmem:[#allocation8 + $0x38] sm:$0xf]
    %v575 = vld [vmem:[#allocation8 + $0x3c] sm:$0xf]
    %v576 = vld [vmem:[#allocation8 + $0x40] sm:$0xf]
    %v577 = vld [vmem:[#allocation8 + $0x44] sm:$0xf]
    %v578 = vld [vmem:[#allocation8 + $0x48] sm:$0xf]
    %v579 = vld [vmem:[#allocation8 + $0x4c] sm:$0xf]
    %v580 = vld [vmem:[#allocation8 + $0x50] sm:$0xf]
    %v581 = vld [vmem:[#allocation8 + $0x54] sm:$0xf]
    %v582 = vld [vmem:[#allocation8 + $0x58] sm:$0xf]
    %v583 = vld [vmem:[#allocation8 + $0x5c] sm:$0xf]
    %v584 = vld [vmem:[#allocation8 + $0x60] sm:$0xf]
    %v585 = vld [vmem:[#allocation8 + $0x64] sm:$0xf]
    %v586 = vld [vmem:[#allocation8 + $0x68] sm:$0xf]
    %v587 = vld [vmem:[#allocation8 + $0x6c] sm:$0xf]
    %v588 = vld [vmem:[#allocation8 + $0x70] sm:$0xf]
    %v589 = vld [vmem:[#allocation8 + $0x74] sm:$0xf]
    %v590 = vld [vmem:[#allocation8 + $0x78] sm:$0xf]
    %v591 = vld [vmem:[#allocation8 + $0x7c] sm:$0xf]
    %v624 = vunpack.c.l.b16 %v560
    %v625 = vunpack.c.l.b16 %v561
    %v626 = vunpack.c.l.b16 %v562
    %v627 = vunpack.c.l.b16 %v563
    %v628 = vunpack.c.l.b16 %v564
    %v629 = vunpack.c.l.b16 %v565
    %v630 = vunpack.c.l.b16 %v566
    %v631 = vunpack.c.l.b16 %v567
    %v632 = vunpack.c.l.b16 %v568
    %v633 = vunpack.c.l.b16 %v569
    %v634 = vunpack.c.l.b16 %v570
    %v635 = vunpack.c.l.b16 %v571
    %v636 = vunpack.c.l.b16 %v572
    %v637 = vunpack.c.l.b16 %v573
    %v638 = vunpack.c.l.b16 %v574
    %v639 = vunpack.c.l.b16 %v575
    %v640 = vunpack.c.l.b16 %v576
    %v641 = vunpack.c.l.b16 %v577
    %v642 = vunpack.c.l.b16 %v578
    %v643 = vunpack.c.l.b16 %v579
    %v644 = vunpack.c.l.b16 %v580
    %v645 = vunpack.c.l.b16 %v581
    %v646 = vunpack.c.l.b16 %v582
    %v647 = vunpack.c.l.b16 %v583
    %v648 = vunpack.c.l.b16 %v584
    %v649 = vunpack.c.l.b16 %v585
    %v650 = vunpack.c.l.b16 %v586
    %v651 = vunpack.c.l.b16 %v587
    %v652 = vunpack.c.l.b16 %v588
    %v653 = vunpack.c.l.b16 %v589
    %v654 = vunpack.c.l.b16 %v590
    %v655 = vunpack.c.l.b16 %v591
    %v656 = vpack.c.b16 %v625, %v624
    %v657 = vpack.c.b16 %v627, %v626
    %v658 = vpack.c.b16 %v629, %v628
    %v659 = vpack.c.b16 %v631, %v630
    %v660 = vpack.c.b16 %v633, %v632
    %v661 = vpack.c.b16 %v635, %v634
    %v662 = vpack.c.b16 %v637, %v636
    %v663 = vpack.c.b16 %v639, %v638
    %v664 = vpack.c.b16 %v641, %v640
    %v665 = vpack.c.b16 %v643, %v642
    %v666 = vpack.c.b16 %v645, %v644
    %v667 = vpack.c.b16 %v647, %v646
    %v668 = vpack.c.b16 %v649, %v648
    %v669 = vpack.c.b16 %v651, %v650
    %v670 = vpack.c.b16 %v653, %v652
    %v671 = vpack.c.b16 %v655, %v654
    %688 = vmatprep.subr.bf16.mxu0 0
    %689 = vmatpush1.bf16.msra.mxu0 %v656
    %690 = vmatprep.subr.bf16.mxu0 0
    %691 = vmatpush1.bf16.msra.mxu0 %v657
    %692 = vmatprep.subr.bf16.mxu0 0
    %693 = vmatpush1.bf16.msra.mxu0 %v658
    %694 = vmatprep.subr.bf16.mxu0 0
    %695 = vmatpush1.bf16.msra.mxu0 %v659
    %696 = vmatprep.subr.bf16.mxu0 0
    %697 = vmatpush1.bf16.msra.mxu0 %v660
    %698 = vmatprep.subr.bf16.mxu0 0
    %699 = vmatpush1.bf16.msra.mxu0 %v661
    %700 = vmatprep.subr.bf16.mxu0 0
    %701 = vmatpush1.bf16.msra.mxu0 %v662
    %702 = vmatprep.subr.bf16.mxu0 0
    %703 = vmatpush1.bf16.msra.mxu0 %v663
    %704 = vmatprep.subr.bf16.mxu0 0
    %705 = vmatpush1.bf16.msra.mxu0 %v664
    %706 = vmatprep.subr.bf16.mxu0 0
    %707 = vmatpush1.bf16.msra.mxu0 %v665
    %708 = vmatprep.subr.bf16.mxu0 0
    %709 = vmatpush1.bf16.msra.mxu0 %v666
    %710 = vmatprep.subr.bf16.mxu0 0
    %711 = vmatpush1.bf16.msra.mxu0 %v667
    %712 = vmatprep.subr.bf16.mxu0 0
    %713 = vmatpush1.bf16.msra.mxu0 %v668
    %714 = vmatprep.subr.bf16.mxu0 0
    %715 = vmatpush1.bf16.msra.mxu0 %v669
    %716 = vmatprep.subr.bf16.mxu0 0
    %717 = vmatpush1.bf16.msra.mxu0 %v670
    %718 = vmatprep.subr.bf16.mxu0 0
    %719 = vmatpush1.bf16.msra.mxu0 %v671
    %720 = vmatprep.mubr.bf16.mxu0 %v545
    %721 = vmatmul.mubr.bf16.gmra.mrb[0].mxu0 %v544
    %v722 = vpop.f32.mrb[0].mxu0
    %v723 = vadd.f32 0.0, %v722
    %v724 = vpop.f32.mrb[0].mxu0
    %v725 = vpop.f32.mrb[0].mxu0
    %v726 = vadd.f32 0.0, %v725
    %v727 = vpop.f32.mrb[0].mxu0
    %728 = vmatprep.mubr.bf16.mxu0 %v547
    %729 = vmatmul.mubr.bf16.gmra.mrb[0].mxu0 %v546
    %v730 = vpop.f32.mrb[0].mxu0
    %v731 = vadd.f32 0.0, %v730
    %v732 = vpop.f32.mrb[0].mxu0
    %v733 = vpop.f32.mrb[0].mxu0
    %v734 = vadd.f32 0.0, %v733
    %v735 = vpop.f32.mrb[0].mxu0
    %736 = vmatprep.mubr.bf16.mxu0 %v549
    %737 = vmatmul.mubr.bf16.gmra.mrb[0].mxu0 %v548
    %v738 = vpop.f32.mrb[0].mxu0
    %v739 = vadd.f32 0.0, %v738
    %v740 = vpop.f32.mrb[0].mxu0
    %v741 = vpop.f32.mrb[0].mxu0
    %v742 = vadd.f32 0.0, %v741
    %v743 = vpop.f32.mrb[0].mxu0
    %744 = vmatprep.mubr.bf16.mxu0 %v551
    %745 = vmatmul.mubr.bf16.gmra.mrb[0].mxu0 %v550
    %v746 = vpop.f32.mrb[0].mxu0
    %v747 = vadd.f32 0.0, %v746
    %v748 = vpop.f32.mrb[0].mxu0
    %v749 = vpop.f32.mrb[0].mxu0
    %v750 = vadd.f32 0.0, %v749
    %v751 = vpop.f32.mrb[0].mxu0
    %752 = vmatprep.mubr.bf16.mxu0 %v553
    %753 = vmatmul.mubr.bf16.gmra.mrb[0].mxu0 %v552
    %v754 = vpop.f32.mrb[0].mxu0
    %v755 = vadd.f32 0.0, %v754
    %v756 = vpop.f32.mrb[0].mxu0
    %v757 = vpop.f32.mrb[0].mxu0
    %v758 = vadd.f32 0.0, %v757
    %v759 = vpop.f32.mrb[0].mxu0
    %760 = vmatprep.mubr.bf16.mxu0 %v555
    %761 = vmatmul.mubr.bf16.gmra.mrb[0].mxu0 %v554
    %v762 = vpop.f32.mrb[0].mxu0
    %v763 = vadd.f32 0.0, %v762
    %v764 = vpop.f32.mrb[0].mxu0
    %v765 = vpop.f32.mrb[0].mxu0
    %v766 = vadd.f32 0.0, %v765
    %v767 = vpop.f32.mrb[0].mxu0
    %768 = vmatprep.mubr.bf16.mxu0 %v557
    %769 = vmatmul.mubr.bf16.gmra.mrb[0].mxu0 %v556
    %v770 = vpop.f32.mrb[0].mxu0
    %v771 = vadd.f32 0.0, %v770
    %v772 = vpop.f32.mrb[0].mxu0
    %v773 = vpop.f32.mrb[0].mxu0
    %v774 = vadd.f32 0.0, %v773
    %v775 = vpop.f32.mrb[0].mxu0
    %776 = vmatprep.mubr.bf16.mxu0 %v559
    %777 = vmatmul.mubr.bf16.gmra.mrb[0].mxu0 %v558
    %v778 = vpop.f32.mrb[0].mxu0
    %v779 = vadd.f32 0.0, %v778
    %v780 = vpop.f32.mrb[0].mxu0
    %v781 = vpop.f32.mrb[0].mxu0
    %v782 = vadd.f32 0.0, %v781
    %v783 = vpop.f32.mrb[0].mxu0
    %784 = vdwg.mxu0
    %v785 = vadd.f32 %v528, %v723
    %v786 = vadd.f32 %v529, %v726
    %v787 = vadd.f32 %v530, %v731
    %v788 = vadd.f32 %v531, %v734
    %v789 = vadd.f32 %v532, %v739
    %v790 = vadd.f32 %v533, %v742
    %v791 = vadd.f32 %v534, %v747
    %v792 = vadd.f32 %v535, %v750
    %v793 = vadd.f32 %v536, %v755
    %v794 = vadd.f32 %v537, %v758
    %v795 = vadd.f32 %v538, %v763
    %v796 = vadd.f32 %v539, %v766
    %v797 = vadd.f32 %v540, %v771
    %v798 = vadd.f32 %v541, %v774
    %v799 = vadd.f32 %v542, %v779
    %v800 = vadd.f32 %v543, %v782
    %801 = vst [vmem:[#allocation2] sm:$0xff] %v785
    %802 = vst [vmem:[#allocation2 + $0x8] sm:$0xff] %v786
    %803 = vst [vmem:[#allocation2 + $0x10] sm:$0xff] %v787
    %804 = vst [vmem:[#allocation2 + $0x18] sm:$0xff] %v788
    %805 = vst [vmem:[#allocation2 + $0x20] sm:$0xff] %v789
    %806 = vst [vmem:[#allocation2 + $0x28] sm:$0xff] %v790
    %807 = vst [vmem:[#allocation2 + $0x30] sm:$0xff] %v791
    %808 = vst [vmem:[#allocation2 + $0x38] sm:$0xff] %v792
    %809 = vst [vmem:[#allocation2 + $0x40] sm:$0xff] %v793
    %810 = vst [vmem:[#allocation2 + $0x48] sm:$0xff] %v794
    %811 = vst [vmem:[#allocation2 + $0x50] sm:$0xff] %v795
    %812 = vst [vmem:[#allocation2 + $0x58] sm:$0xff] %v796
    %813 = vst [vmem:[#allocation2 + $0x60] sm:$0xff] %v797
    %814 = vst [vmem:[#allocation2 + $0x68] sm:$0xff] %v798
    %815 = vst [vmem:[#allocation2 + $0x70] sm:$0xff] %v799
    %816 = vst [vmem:[#allocation2 + $0x78] sm:$0xff] %v800
    // Predicated region
    $region38: #{tpu_custom_call.1} parent=1 // pred_check
      %p817 = pneg %p63
    $region39: #{tpu_custom_call.1} parent=1 // pred_check_branch
      %819 = sbr.rel (%p817) target = $region41
    $region40: #{tpu_custom_call.1} parent=1 // pred_region
      %v820 = vld [vmem:[#allocation2] sm:$0xff]
      %v821 = vld [vmem:[#allocation2 + $0x8] sm:$0xff]
      %v822 = vld [vmem:[#allocation2 + $0x10] sm:$0xff]
      %v823 = vld [vmem:[#allocation2 + $0x18] sm:$0xff]
      %v824 = vld [vmem:[#allocation2 + $0x20] sm:$0xff]
      %v825 = vld [vmem:[#allocation2 + $0x28] sm:$0xff]
      %v826 = vld [vmem:[#allocation2 + $0x30] sm:$0xff]
      %v827 = vld [vmem:[#allocation2 + $0x38] sm:$0xff]
      %v828 = vld [vmem:[#allocation2 + $0x40] sm:$0xff]
      %v829 = vld [vmem:[#allocation2 + $0x48] sm:$0xff]
      %v830 = vld [vmem:[#allocation2 + $0x50] sm:$0xff]
      %v831 = vld [vmem:[#allocation2 + $0x58] sm:$0xff]
      %v832 = vld [vmem:[#allocation2 + $0x60] sm:$0xff]
      %v833 = vld [vmem:[#allocation2 + $0x68] sm:$0xff]
      %v834 = vld [vmem:[#allocation2 + $0x70] sm:$0xff]
      %v835 = vld [vmem:[#allocation2 + $0x78] sm:$0xff]
      %v836 = vld [vmem:[%s4] sm:$0x1]
      %v838 = vlaneseq
      %v839 = vshrl.u32 %v838, 7
      %v840 = vsub.s32 0, %v839
      %v841 = vrot.slane %v836, %v840
      %v843 = vadd.f32 %v820, %v841
      %v844 = vadd.f32 %v821, %v841
      %v845 = vadd.f32 %v822, %v841
      %v846 = vadd.f32 %v823, %v841
      %v847 = vadd.f32 %v824, %v841
      %v848 = vadd.f32 %v825, %v841
      %v849 = vadd.f32 %v826, %v841
      %v850 = vadd.f32 %v827, %v841
      %v851 = vadd.f32 %v828, %v841
      %v852 = vadd.f32 %v829, %v841
      %v853 = vadd.f32 %v830, %v841
      %v854 = vadd.f32 %v831, %v841
      %v855 = vadd.f32 %v832, %v841
      %v856 = vadd.f32 %v833, %v841
      %v857 = vadd.f32 %v834, %v841
      %v858 = vadd.f32 %v835, %v841
      %859 = vst [vmem:[#allocation9] sm:$0xff] %v843
      %860 = vst [vmem:[#allocation9 + $0x8] sm:$0xff] %v844
      %861 = vst [vmem:[#allocation9 + $0x10] sm:$0xff] %v845
      %862 = vst [vmem:[#allocation9 + $0x18] sm:$0xff] %v846
      %863 = vst [vmem:[#allocation9 + $0x20] sm:$0xff] %v847
      %864 = vst [vmem:[#allocation9 + $0x28] sm:$0xff] %v848
      %865 = vst [vmem:[#allocation9 + $0x30] sm:$0xff] %v849
      %866 = vst [vmem:[#allocation9 + $0x38] sm:$0xff] %v850
      %867 = vst [vmem:[#allocation9 + $0x40] sm:$0xff] %v851
      %868 = vst [vmem:[#allocation9 + $0x48] sm:$0xff] %v852
      %869 = vst [vmem:[#allocation9 + $0x50] sm:$0xff] %v853
      %870 = vst [vmem:[#allocation9 + $0x58] sm:$0xff] %v854
      %871 = vst [vmem:[#allocation9 + $0x60] sm:$0xff] %v855
      %872 = vst [vmem:[#allocation9 + $0x68] sm:$0xff] %v856
      %873 = vst [vmem:[#allocation9 + $0x70] sm:$0xff] %v857
      %874 = vst [vmem:[#allocation9 + $0x78] sm:$0xff] %v858
    $region41: #{tpu_custom_call.1} parent=1 // pred_fallthru
      _
    // Predicated region
    $region42: #{tpu_custom_call.1} parent=1 // pred_check
      _
    $region43: #{tpu_custom_call.1} parent=1 // pred_check_branch
      %876 = sbr.rel (0) target = $region45
    $region44: #{tpu_custom_call.1} parent=1 // pred_region
      %s878 = ssub.s32 2048, 2048
      %879 = vsyncadd [#allocation5], %s878
      %s880 = sshll.u32 [#allocation9], 4
      %s881 = int_to_ptr.vmem [resolvable:$true] %s880
      %886 = dma.vmem_to_hbm [thread:$0]  %s881, 2048, %s5, [#allocation5], 128, 128, 8
    $region45: #{tpu_custom_call.1} parent=1 // pred_fallthru
      _
    // Predicated region
    $region46: #{tpu_custom_call.1} parent=1 // pred_check
      _
    $region47: #{tpu_custom_call.1} parent=1 // pred_check_branch
      %888 = sbr.rel (0) target = $region49
    $region48: #{tpu_custom_call.1} parent=1 // pred_region
      %889 = dma.done [#allocation5], 2048
    $region49: #{tpu_custom_call.1} parent=1 // pred_fallthru
      _
    %890 = vsyncpa [#allocation4], 1
    %891 = vsyncpa [#allocation7], 1
    %892 = vsyncpa [#allocation5], 1

</llo_original>
